<compile_context>
chip_gen: v5e
topology: v5e:2x2
jax: 0.10.0
libtpu: 0.0.40
codegen_flags: <defaults>
</compile_context>

<pallas_src>
import jax
import jax.numpy as jnp
from jax.experimental import pallas as pl
from jax.experimental.pallas import tpu as pltpu


# ---------------------------------------------------------------------------
# Packed parameter layout inside the flat f32[32] SMEM buffer:
#   W1[j,k] -> 4*j + k      (j in 0..2, k in 0..3)   indices  0..11
#   b1[j]   -> 12 + j                                 indices 12..14
#   W2[j,k] -> 15 + 3*j + k (j in 0..1, k in 0..2)    indices 15..20
#   b2[j]   -> 21 + j                                 indices 21..22
#   W3[0,k] -> 23 + k       (k in 0..1)               indices 23..24
#   b3[0]   -> 25                                     index   25
# ---------------------------------------------------------------------------
_PACKED_LEN = 32  # padded (26 used)


def _round_up(a, b):
    return (a + b - 1) // b * b


def _make_kernel(n_chunks):
    """Kernel over one (4, TS, TL) input block / (TS, TL) output block."""

    def kernel(p_ref, x_ref, o_ref):
        # p_ref: SMEM f32[32] packed parameters (resident for all grid steps)
        # x_ref: VMEM f32[4, TS, TL]  (feature, sublane-batch, lane-batch)
        # o_ref: VMEM f32[TS, TL]     lane-dense output block

        # Read the 26 parameters once into scalar registers (cheap SMEM loads).
        w1 = [[p_ref[4 * j + k] for k in range(4)] for j in range(3)]
        b1 = [p_ref[12 + j] for j in range(3)]
        w2 = [[p_ref[15 + 3 * j + k] for k in range(3)] for j in range(2)]
        b2 = [p_ref[21 + j] for j in range(2)]
        w3 = [p_ref[23 + k] for k in range(2)]
        b3 = p_ref[25]

        def chunk(r0):
            rows = pl.ds(r0, 8)
            # Four (8, TL) full-vreg feature slabs -> every VPU op uses all
            # 8 sublanes x 128+ lanes.
            xs = [x_ref[k, rows, :] for k in range(4)]

            # Layer 1: h1 = relu(W1 @ x + b1)  (unrolled VPU FMAs, no MXU)
            h1 = []
            for j in range(3):
                acc = xs[0] * w1[j][0]
                for k in range(1, 4):
                    acc = acc + xs[k] * w1[j][k]
                h1.append(jnp.maximum(acc + b1[j], 0.0))

            # Layer 2: h2 = relu(W2 @ h1 + b2)
            h2 = []
            for j in range(2):
                acc = h1[0] * w2[j][0]
                for k in range(1, 3):
                    acc = acc + h1[k] * w2[j][k]
                h2.append(jnp.maximum(acc + b2[j], 0.0))

            # Layer 3: sigmoid(W3 @ h2 + b3) via a single EUP tanh (exact).
            z = h2[0] * w3[0] + h2[1] * w3[1] + b3
            o_ref[rows, :] = 0.5 * jnp.tanh(0.5 * z) + 0.5

        if n_chunks <= 8:
            # Small blocks: static unroll (trace-time loop).
            for c in range(n_chunks):
                chunk(c * 8)
        else:
            # Large blocks: bounded live ranges, intermediates stay in vregs.
            @pl.loop(0, n_chunks)
            def _(c):
                chunk(pl.multiple_of(c * 8, 8))

    return kernel


def pack_params(params):
    """Pack PyTorch-style (out,in) weights and (out,) biases into one f32[32].

    Do this ONCE (outside the per-call path) and reuse the packed buffer.
    """
    flat = jnp.concatenate([
        params["w1"].reshape(-1),  # (12,)
        params["b1"],              # (3,)
        params["w2"].reshape(-1),  # (6,)
        params["b2"],              # (2,)
        params["w3"].reshape(-1),  # (2,)
        params["b3"],              # (1,)
    ]).astype(jnp.float32)
    return jnp.pad(flat, (0, _PACKED_LEN - flat.shape[0]))


def simplenet_forward(x, packed_params, *, target_tile_batch=128 * 1024):
    """x: (B, 4) float32 (PyTorch layout). packed_params: f32[32] from pack_params.

    Returns (B, 1) float32 -- same semantics as SimpleNet.forward.
    """
    B = x.shape[0]

    # Lane / sublane geometry of one tile: each batch element b maps to
    # (sublane s, lane l) with s = b // TL, l = b % TL (same mapping for
    # input and output, so no permutation on the way back).
    TL = 512 if B >= 8 * 512 else 128     # lane width (multiple of 128)
    SUB = 8 * TL                          # batch elems per (8, TL) vreg chunk

    # Tile size (batch elems per grid step): ~1-2 MiB input per step for big
    # batches, but keep >=2 tiles when possible so the "parallel" batch axis
    # lands on both TensorCores on v7x; always a multiple of SUB.
    tb = max(SUB, min(_round_up(target_tile_batch, SUB),
                      _round_up(pl.cdiv(B, 2), SUB)))
    tb = min(tb, 1 << 20)                 # hard cap: ~40*tb bytes of VMEM <= 40 MiB
    n_tiles = pl.cdiv(B, tb)
    Bp = n_tiles * tb
    TS = tb // TL                         # sublanes per tile (multiple of 8)
    S_total = Bp // TL

    # Host layout pass: pad at most one tile, then one transpose + free reshape.
    # TODO(synk): callers that already hold feature-major (4, B) activations can
    # skip this pass entirely by reshaping to (4, S_total, TL) themselves.
    xt = x.astype(jnp.float32)
    if Bp != B:
        xt = jnp.pad(xt, ((0, Bp - B), (0, 0)))
    x3 = xt.T.reshape(4, S_total, TL)

    out = pl.pallas_call(
        _make_kernel(TS // 8),
        out_shape=jax.ShapeDtypeStruct((S_total, TL), jnp.float32),
        grid=(n_tiles,),
        in_specs=[
            # Packed params: single tiny SMEM-resident buffer, fetched once.
            pl.BlockSpec(memory_space=pltpu.MemorySpace.SMEM),
            # x tile: (4, TS, TL), auto double-buffered over the batch grid.
            pl.BlockSpec((4, TS, TL), lambda t: (0, t, 0)),
        ],
        out_specs=pl.BlockSpec((TS, TL), lambda t: (t, 0)),
        compiler_params=pltpu.CompilerParams(
            dimension_semantics=("parallel",),   # shard batch tiles across TCs on v7x
            vmem_limit_bytes=min(48 << 20, max(32 << 20, 64 * tb)),
        ),
        cost_estimate=pl.CostEstimate(
            flops=47 * Bp, transcendentals=Bp, bytes_accessed=20 * Bp),
    )(packed_params, x3)

    return out.reshape(Bp)[:B][:, None]


def init_params(key):
    """PyTorch nn.Linear default init: U(-1/sqrt(fan_in), 1/sqrt(fan_in))."""
    def linear(k, out_f, in_f):
        kw, kb = jax.random.split(k)
        bound = 1.0 / jnp.sqrt(jnp.float32(in_f))
        w = jax.random.uniform(kw, (out_f, in_f), jnp.float32, -bound, bound)
        b = jax.random.uniform(kb, (out_f,), jnp.float32, -bound, bound)
        return w, b

    k1, k2, k3 = jax.random.split(key, 3)
    w1, b1 = linear(k1, 3, 4)
    w2, b2 = linear(k2, 2, 3)
    w3, b3 = linear(k3, 1, 2)
    return {"w1": w1, "b1": b1, "w2": w2, "b2": b2, "w3": w3, "b3": b3}


def reference_forward(x, params):
    h1 = jnp.maximum(x @ params["w1"].T + params["b1"], 0.0)
    h2 = jnp.maximum(h1 @ params["w2"].T + params["b2"], 0.0)
    return jax.nn.sigmoid(h2 @ params["w3"].T + params["b3"])


# TODO(synk): SimpleNet's training machinery (fit / MSELoss / optimizer / metric
# bookkeeping) is host-side logic, not part of the forward kernel.

if __name__ == "__main__":
    key = jax.random.PRNGKey(0)
    kx, kx2, kp = jax.random.split(key, 3)
    params = init_params(kp)
    packed = pack_params(params)  # packed once, kernel-ready layout

    # Small demo batch: single (4, 8, 128) tile.
    batch = 256
    x = jax.random.normal(kx, (batch, 4), jnp.float32)
    out = jax.block_until_ready(simplenet_forward(x, packed))
    ref = reference_forward(x, params)
    assert out.shape == (batch, 1), out.shape
    assert jnp.allclose(out, ref, atol=1e-5, rtol=1e-5)

    # Ragged / multi-tile check: B not a multiple of the tile, 2 grid steps.
    batch2 = 1500
    x2 = jax.random.normal(kx2, (batch2, 4), jnp.float32)
    out2 = jax.block_until_ready(simplenet_forward(x2, packed))
    ref2 = reference_forward(x2, params)
    assert out2.shape == (batch2, 1), out2.shape
    assert jnp.allclose(out2, ref2, atol=1e-5, rtol=1e-5)

    print("KERNEL_OK")
</pallas_src>

<mosaic_0001>
module attributes {stable_mosaic.version = 11 : i64} {
  func.func @kernel(%arg0: i32, %arg1: memref<32xf32, #tpu.memory_space<smem>>, %arg2: memref<4x8x128xf32, #tpu.memory_space<vmem>>, %arg3: memref<8x128xf32, #tpu.memory_space<vmem>>) attributes {dimension_semantics = [#tpu.dimension_semantics<parallel>], iteration_bounds = array<i64: 1>, scalar_prefetch = 0 : i64, scratch_operands = 0 : i64, tpu.core_type = #tpu.core_type<tc>, window_params = [{transform_indices = @transform_0, window_bounds = array<i64: 32>}, {transform_indices = @transform_1, window_bounds = array<i64: 4, 8, 128>}, {transform_indices = @transform_2, window_bounds = array<i64: 8, 128>}]} {
    %c0 = arith.constant 0 : index
    %0 = memref.load %arg1[%c0] : memref<32xf32, #tpu.memory_space<smem>>
    %c1 = arith.constant 1 : index
    %1 = memref.load %arg1[%c1] : memref<32xf32, #tpu.memory_space<smem>>
    %c2 = arith.constant 2 : index
    %2 = memref.load %arg1[%c2] : memref<32xf32, #tpu.memory_space<smem>>
    %c3 = arith.constant 3 : index
    %3 = memref.load %arg1[%c3] : memref<32xf32, #tpu.memory_space<smem>>
    %c4 = arith.constant 4 : index
    %4 = memref.load %arg1[%c4] : memref<32xf32, #tpu.memory_space<smem>>
    %c5 = arith.constant 5 : index
    %5 = memref.load %arg1[%c5] : memref<32xf32, #tpu.memory_space<smem>>
    %c6 = arith.constant 6 : index
    %6 = memref.load %arg1[%c6] : memref<32xf32, #tpu.memory_space<smem>>
    %c7 = arith.constant 7 : index
    %7 = memref.load %arg1[%c7] : memref<32xf32, #tpu.memory_space<smem>>
    %c8 = arith.constant 8 : index
    %8 = memref.load %arg1[%c8] : memref<32xf32, #tpu.memory_space<smem>>
    %c9 = arith.constant 9 : index
    %9 = memref.load %arg1[%c9] : memref<32xf32, #tpu.memory_space<smem>>
    %c10 = arith.constant 10 : index
    %10 = memref.load %arg1[%c10] : memref<32xf32, #tpu.memory_space<smem>>
    %c11 = arith.constant 11 : index
    %11 = memref.load %arg1[%c11] : memref<32xf32, #tpu.memory_space<smem>>
    %c12 = arith.constant 12 : index
    %12 = memref.load %arg1[%c12] : memref<32xf32, #tpu.memory_space<smem>>
    %c13 = arith.constant 13 : index
    %13 = memref.load %arg1[%c13] : memref<32xf32, #tpu.memory_space<smem>>
    %c14 = arith.constant 14 : index
    %14 = memref.load %arg1[%c14] : memref<32xf32, #tpu.memory_space<smem>>
    %c15 = arith.constant 15 : index
    %15 = memref.load %arg1[%c15] : memref<32xf32, #tpu.memory_space<smem>>
    %c16 = arith.constant 16 : index
    %16 = memref.load %arg1[%c16] : memref<32xf32, #tpu.memory_space<smem>>
    %c17 = arith.constant 17 : index
    %17 = memref.load %arg1[%c17] : memref<32xf32, #tpu.memory_space<smem>>
    %c18 = arith.constant 18 : index
    %18 = memref.load %arg1[%c18] : memref<32xf32, #tpu.memory_space<smem>>
    %c19 = arith.constant 19 : index
    %19 = memref.load %arg1[%c19] : memref<32xf32, #tpu.memory_space<smem>>
    %c20 = arith.constant 20 : index
    %20 = memref.load %arg1[%c20] : memref<32xf32, #tpu.memory_space<smem>>
    %c21 = arith.constant 21 : index
    %21 = memref.load %arg1[%c21] : memref<32xf32, #tpu.memory_space<smem>>
    %c22 = arith.constant 22 : index
    %22 = memref.load %arg1[%c22] : memref<32xf32, #tpu.memory_space<smem>>
    %c23 = arith.constant 23 : index
    %23 = memref.load %arg1[%c23] : memref<32xf32, #tpu.memory_space<smem>>
    %c24 = arith.constant 24 : index
    %24 = memref.load %arg1[%c24] : memref<32xf32, #tpu.memory_space<smem>>
    %c25 = arith.constant 25 : index
    %25 = memref.load %arg1[%c25] : memref<32xf32, #tpu.memory_space<smem>>
    %c0_0 = arith.constant 0 : index
    %c0_1 = arith.constant 0 : index
    %c0_2 = arith.constant 0 : index
    %26 = vector.load %arg2[%c0_0, %c0_1, %c0_2] : memref<4x8x128xf32, #tpu.memory_space<vmem>>, vector<1x8x128xf32>
    %27 = vector.shape_cast %26 : vector<1x8x128xf32> to vector<8x128xf32>
    %c1_3 = arith.constant 1 : index
    %c0_4 = arith.constant 0 : index
    %c0_5 = arith.constant 0 : index
    %28 = vector.load %arg2[%c1_3, %c0_4, %c0_5] : memref<4x8x128xf32, #tpu.memory_space<vmem>>, vector<1x8x128xf32>
    %29 = vector.shape_cast %28 : vector<1x8x128xf32> to vector<8x128xf32>
    %c2_6 = arith.constant 2 : index
    %c0_7 = arith.constant 0 : index
    %c0_8 = arith.constant 0 : index
    %30 = vector.load %arg2[%c2_6, %c0_7, %c0_8] : memref<4x8x128xf32, #tpu.memory_space<vmem>>, vector<1x8x128xf32>
    %31 = vector.shape_cast %30 : vector<1x8x128xf32> to vector<8x128xf32>
    %c3_9 = arith.constant 3 : index
    %c0_10 = arith.constant 0 : index
    %c0_11 = arith.constant 0 : index
    %32 = vector.load %arg2[%c3_9, %c0_10, %c0_11] : memref<4x8x128xf32, #tpu.memory_space<vmem>>, vector<1x8x128xf32>
    %33 = vector.shape_cast %32 : vector<1x8x128xf32> to vector<8x128xf32>
    %34 = vector.broadcast %0 : f32 to vector<8x128xf32>
    %35 = arith.mulf %27, %34 : vector<8x128xf32>
    %36 = vector.broadcast %1 : f32 to vector<8x128xf32>
    %37 = arith.mulf %29, %36 : vector<8x128xf32>
    %38 = arith.addf %35, %37 : vector<8x128xf32>
    %39 = vector.broadcast %2 : f32 to vector<8x128xf32>
    %40 = arith.mulf %31, %39 : vector<8x128xf32>
    %41 = arith.addf %38, %40 : vector<8x128xf32>
    %42 = vector.broadcast %3 : f32 to vector<8x128xf32>
    %43 = arith.mulf %33, %42 : vector<8x128xf32>
    %44 = arith.addf %41, %43 : vector<8x128xf32>
    %45 = vector.broadcast %12 : f32 to vector<8x128xf32>
    %46 = arith.addf %44, %45 : vector<8x128xf32>
    %cst = arith.constant 0.000000e+00 : f32
    %47 = vector.broadcast %cst : f32 to vector<8x128xf32>
    %48 = arith.maximumf %46, %47 : vector<8x128xf32>
    %49 = vector.broadcast %4 : f32 to vector<8x128xf32>
    %50 = arith.mulf %27, %49 : vector<8x128xf32>
    %51 = vector.broadcast %5 : f32 to vector<8x128xf32>
    %52 = arith.mulf %29, %51 : vector<8x128xf32>
    %53 = arith.addf %50, %52 : vector<8x128xf32>
    %54 = vector.broadcast %6 : f32 to vector<8x128xf32>
    %55 = arith.mulf %31, %54 : vector<8x128xf32>
    %56 = arith.addf %53, %55 : vector<8x128xf32>
    %57 = vector.broadcast %7 : f32 to vector<8x128xf32>
    %58 = arith.mulf %33, %57 : vector<8x128xf32>
    %59 = arith.addf %56, %58 : vector<8x128xf32>
    %60 = vector.broadcast %13 : f32 to vector<8x128xf32>
    %61 = arith.addf %59, %60 : vector<8x128xf32>
    %cst_12 = arith.constant 0.000000e+00 : f32
    %62 = vector.broadcast %cst_12 : f32 to vector<8x128xf32>
    %63 = arith.maximumf %61, %62 : vector<8x128xf32>
    %64 = vector.broadcast %8 : f32 to vector<8x128xf32>
    %65 = arith.mulf %27, %64 : vector<8x128xf32>
    %66 = vector.broadcast %9 : f32 to vector<8x128xf32>
    %67 = arith.mulf %29, %66 : vector<8x128xf32>
    %68 = arith.addf %65, %67 : vector<8x128xf32>
    %69 = vector.broadcast %10 : f32 to vector<8x128xf32>
    %70 = arith.mulf %31, %69 : vector<8x128xf32>
    %71 = arith.addf %68, %70 : vector<8x128xf32>
    %72 = vector.broadcast %11 : f32 to vector<8x128xf32>
    %73 = arith.mulf %33, %72 : vector<8x128xf32>
    %74 = arith.addf %71, %73 : vector<8x128xf32>
    %75 = vector.broadcast %14 : f32 to vector<8x128xf32>
    %76 = arith.addf %74, %75 : vector<8x128xf32>
    %cst_13 = arith.constant 0.000000e+00 : f32
    %77 = vector.broadcast %cst_13 : f32 to vector<8x128xf32>
    %78 = arith.maximumf %76, %77 : vector<8x128xf32>
    %79 = vector.broadcast %15 : f32 to vector<8x128xf32>
    %80 = arith.mulf %48, %79 : vector<8x128xf32>
    %81 = vector.broadcast %16 : f32 to vector<8x128xf32>
    %82 = arith.mulf %63, %81 : vector<8x128xf32>
    %83 = arith.addf %80, %82 : vector<8x128xf32>
    %84 = vector.broadcast %17 : f32 to vector<8x128xf32>
    %85 = arith.mulf %78, %84 : vector<8x128xf32>
    %86 = arith.addf %83, %85 : vector<8x128xf32>
    %87 = vector.broadcast %21 : f32 to vector<8x128xf32>
    %88 = arith.addf %86, %87 : vector<8x128xf32>
    %cst_14 = arith.constant 0.000000e+00 : f32
    %89 = vector.broadcast %cst_14 : f32 to vector<8x128xf32>
    %90 = arith.maximumf %88, %89 : vector<8x128xf32>
    %91 = vector.broadcast %18 : f32 to vector<8x128xf32>
    %92 = arith.mulf %48, %91 : vector<8x128xf32>
    %93 = vector.broadcast %19 : f32 to vector<8x128xf32>
    %94 = arith.mulf %63, %93 : vector<8x128xf32>
    %95 = arith.addf %92, %94 : vector<8x128xf32>
    %96 = vector.broadcast %20 : f32 to vector<8x128xf32>
    %97 = arith.mulf %78, %96 : vector<8x128xf32>
    %98 = arith.addf %95, %97 : vector<8x128xf32>
    %99 = vector.broadcast %22 : f32 to vector<8x128xf32>
    %100 = arith.addf %98, %99 : vector<8x128xf32>
    %cst_15 = arith.constant 0.000000e+00 : f32
    %101 = vector.broadcast %cst_15 : f32 to vector<8x128xf32>
    %102 = arith.maximumf %100, %101 : vector<8x128xf32>
    %103 = vector.broadcast %23 : f32 to vector<8x128xf32>
    %104 = arith.mulf %90, %103 : vector<8x128xf32>
    %105 = vector.broadcast %24 : f32 to vector<8x128xf32>
    %106 = arith.mulf %102, %105 : vector<8x128xf32>
    %107 = arith.addf %104, %106 : vector<8x128xf32>
    %108 = vector.broadcast %25 : f32 to vector<8x128xf32>
    %109 = arith.addf %107, %108 : vector<8x128xf32>
    %cst_16 = arith.constant 5.000000e-01 : f32
    %110 = vector.broadcast %cst_16 : f32 to vector<8x128xf32>
    %111 = arith.mulf %110, %109 : vector<8x128xf32>
    %112 = math.tanh %111 : vector<8x128xf32>
    %cst_17 = arith.constant 5.000000e-01 : f32
    %113 = vector.broadcast %cst_17 : f32 to vector<8x128xf32>
    %114 = arith.mulf %113, %112 : vector<8x128xf32>
    %cst_18 = arith.constant 5.000000e-01 : f32
    %115 = vector.broadcast %cst_18 : f32 to vector<8x128xf32>
    %116 = arith.addf %114, %115 : vector<8x128xf32>
    %c0_19 = arith.constant 0 : index
    %c0_20 = arith.constant 0 : index
    %117 = vector.load %arg3[%c0_19, %c0_20] : memref<8x128xf32, #tpu.memory_space<vmem>>, vector<8x128xf32>
    tpu.vector_store %arg3[%c0_19, %c0_20], %116 {strides = array<i32>} : memref<8x128xf32, #tpu.memory_space<vmem>>, vector<8x128xf32>,
    return
  }
  func.func @transform_0(%arg0: i32) -> i32 {
    %c0_i32 = arith.constant 0 : i32
    %c0_i32_0 = arith.constant 0 : i32
    return %c0_i32 : i32
  }
  func.func @transform_1(%arg0: i32) -> (i32, i32, i32) {
    %c0_i32 = arith.constant 0 : i32
    %c0_i32_0 = arith.constant 0 : i32
    %c0_i32_1 = arith.constant 0 : i32
    return %c0_i32, %arg0, %c0_i32_0 : i32, i32, i32
  }
  func.func @transform_2(%arg0: i32) -> (i32, i32) {
    %c0_i32 = arith.constant 0 : i32
    %c0_i32_0 = arith.constant 0 : i32
    return %arg0, %c0_i32 : i32, i32
  }
}

</mosaic_0001>

<llo_original>
// kernel: tpu_custom_call.1
$region0: #{tpu_custom_call.1}
  #allocation0 [shape = 'u32[]', space=smem, size = 0x4, offset = 0x4, fixed_abs, tag = 'smem constant byte address 0x4 - core index']
  #allocation1 [shape = 'u32[72,128]{1,0:T(1,128)}', space=vmem, size = 0x9000, scoped, tag = 'internal scratch']
  %s0 = inlined_call_operand.hbm [shape: f32[32], index: 0, kind: input, shape index: {}]
  %s1 = inlined_call_operand.hbm [shape: f32[4,8,128], index: 1, kind: input, shape index: {}]
  %s2 = inlined_call_operand.hbm [shape: f32[8,128], index: 2, kind: output, shape index: {}]
  %s3 = sld [smem:[#allocation0]]
  $region26: #{tpu_custom_call.1} parent=0
    _
  %s5 = ssub.s32 1, %s3
  %s6 = scalar_select 0, %s5, %s3
  $region1: #{tpu_custom_call.1} parent=0
    #allocation2 [shape = 'u8[512]{0}', space=smem, size = 0x200, scoped, tag = 'input window, operand 0, single buffered']
    #allocation3 [shape = 's32[1]{0}', space=sflag, size = 0x4, scoped, tag = 'scoped memory for tpu_custom_call.1']
    #allocation4 [shape = 's32[1]{0}', space=sflag, size = 0x4, scoped, tag = 'scoped memory for tpu_custom_call.1']
    #allocation5 [shape = 's32[1]{0}', space=sflag, size = 0x4, scoped, tag = 'scoped memory for tpu_custom_call.1']
    #allocation6 [shape = 'u8[16384]{0}', space=vmem, size = 0x4000, scoped, tag = 'input window, operand 1, single buffered']
    #allocation7 [shape = 'u8[4096]{0}', space=vmem, size = 0x1000, scoped, tag = 'output window, operand 0, single buffered']
    %7 = vsyncpa [#allocation5], 0
    %8 = vsyncpa [#allocation3], 0
    %9 = vsyncpa [#allocation4], 0
    // Predicated region
    $region2: #{tpu_custom_call.1} parent=1 // pred_check
      _
    $region3: #{tpu_custom_call.1} parent=1 // pred_check_branch
      %11 = sbr.rel (0) target = $region5
    $region4: #{tpu_custom_call.1} parent=1 // pred_region
      %13 = vsyncadd [#allocation5], 0
      %s15 = sshll.u32 %s0, 4
      %s16 = int_to_ptr.hbm [resolvable:$true] %s15
      %18 = dma.hbm_to_smem %s16, 16, [#allocation2], [#allocation5]
    $region5: #{tpu_custom_call.1} parent=1 // pred_fallthru
      _
    // Predicated region
    $region6: #{tpu_custom_call.1} parent=1 // pred_check
      _
    $region7: #{tpu_custom_call.1} parent=1 // pred_check_branch
      %20 = sbr.rel (0) target = $region9
    $region8: #{tpu_custom_call.1} parent=1 // pred_region
      %22 = vsyncadd [#allocation3], 0
      %s23 = sshll.u32 %s1, 4
      %s24 = int_to_ptr.hbm [resolvable:$true] %s23
      %s25 = sshll.u32 [#allocation6], 4
      %s26 = int_to_ptr.vmem [resolvable:$true] %s25
      %31 = dma.hbm_to_vmem [thread:$0]  %s24, 512, %s26, [#allocation3], 128, 128, 8
    $region9: #{tpu_custom_call.1} parent=1 // pred_fallthru
      _
    // Predicated region
    $region10: #{tpu_custom_call.1} parent=1 // pred_check
      _
    $region11: #{tpu_custom_call.1} parent=1 // pred_check_branch
      %33 = sbr.rel (0) target = $region13
    $region12: #{tpu_custom_call.1} parent=1 // pred_region
      %35 = dma.done [#allocation5], 16
    $region13: #{tpu_custom_call.1} parent=1 // pred_fallthru
      _
    // Predicated region
    $region14: #{tpu_custom_call.1} parent=1 // pred_check
      _
    $region15: #{tpu_custom_call.1} parent=1 // pred_check_branch
      %37 = sbr.rel (0) target = $region17
    $region16: #{tpu_custom_call.1} parent=1 // pred_region
      %39 = dma.done [#allocation3], 512
    $region17: #{tpu_custom_call.1} parent=1 // pred_fallthru
      _
    %40 = sfence
    %s41 = sld [smem:[#allocation2]]
    %s42 = sld [smem:[#allocation2 + $0x1]]
    %s43 = sld [smem:[#allocation2 + $0x2]]
    %s44 = sld [smem:[#allocation2 + $0x3]]
    %s45 = sld [smem:[#allocation2 + $0x4]]
    %s46 = sld [smem:[#allocation2 + $0x5]]
    %s47 = sld [smem:[#allocation2 + $0x6]]
    %s48 = sld [smem:[#allocation2 + $0x7]]
    %s49 = sld [smem:[#allocation2 + $0x8]]
    %s50 = sld [smem:[#allocation2 + $0x9]]
    %s51 = sld [smem:[#allocation2 + $0xa]]
    %s52 = sld [smem:[#allocation2 + $0xb]]
    %s53 = sld [smem:[#allocation2 + $0xc]]
    %s54 = sld [smem:[#allocation2 + $0xd]]
    %s55 = sld [smem:[#allocation2 + $0xe]]
    %s56 = sld [smem:[#allocation2 + $0xf]]
    %s57 = sld [smem:[#allocation2 + $0x10]]
    %s58 = sld [smem:[#allocation2 + $0x11]]
    %s59 = sld [smem:[#allocation2 + $0x12]]
    %s60 = sld [smem:[#allocation2 + $0x13]]
    %s61 = sld [smem:[#allocation2 + $0x14]]
    %s62 = sld [smem:[#allocation2 + $0x15]]
    %s63 = sld [smem:[#allocation2 + $0x16]]
    %s64 = sld [smem:[#allocation2 + $0x17]]
    %s65 = sld [smem:[#allocation2 + $0x18]]
    %s66 = sld [smem:[#allocation2 + $0x19]]
    %v67 = vld [vmem:[#allocation6] sm:$0xff]
    %s68 = scalar_lea.vmem [#allocation6], 8
    %v69 = vld [vmem:[%s68] sm:$0xff]
    %s70 = scalar_lea.vmem [#allocation6], 16
    %v71 = vld [vmem:[%s70] sm:$0xff]
    %s72 = scalar_lea.vmem [#allocation6], 24
    %v73 = vld [vmem:[%s72] sm:$0xff]
    %v74 = vstv %s41
    %v75 = vmul.f32 %v67, %v74
    %v76 = vstv %s42
    %v77 = vmul.f32 %v69, %v76
    %v78 = vadd.f32 %v75, %v77
    %v79 = vstv %s43
    %v80 = vmul.f32 %v71, %v79
    %v81 = vadd.f32 %v78, %v80
    %v82 = vstv %s44
    %v83 = vmul.f32 %v73, %v82
    %v84 = vadd.f32 %v81, %v83
    %v85 = vstv %s53
    %v86 = vadd.f32 %v84, %v85
    %v87 = vmax.f32 %v86, 0.0
    %v88 = vstv %s45
    %v89 = vmul.f32 %v67, %v88
    %v90 = vstv %s46
    %v91 = vmul.f32 %v69, %v90
    %v92 = vadd.f32 %v89, %v91
    %v93 = vstv %s47
    %v94 = vmul.f32 %v71, %v93
    %v95 = vadd.f32 %v92, %v94
    %v96 = vstv %s48
    %v97 = vmul.f32 %v73, %v96
    %v98 = vadd.f32 %v95, %v97
    %v99 = vstv %s54
    %v100 = vadd.f32 %v98, %v99
    %v101 = vmax.f32 %v100, 0.0
    %v102 = vstv %s49
    %v103 = vmul.f32 %v67, %v102
    %v104 = vstv %s50
    %v105 = vmul.f32 %v69, %v104
    %v106 = vadd.f32 %v103, %v105
    %v107 = vstv %s51
    %v108 = vmul.f32 %v71, %v107
    %v109 = vadd.f32 %v106, %v108
    %v110 = vstv %s52
    %v111 = vmul.f32 %v73, %v110
    %v112 = vadd.f32 %v109, %v111
    %v113 = vstv %s55
    %v114 = vadd.f32 %v112, %v113
    %v115 = vmax.f32 %v114, 0.0
    %v116 = vstv %s56
    %v117 = vmul.f32 %v87, %v116
    %v118 = vstv %s57
    %v119 = vmul.f32 %v101, %v118
    %v120 = vadd.f32 %v117, %v119
    %v121 = vstv %s58
    %v122 = vmul.f32 %v115, %v121
    %v123 = vadd.f32 %v120, %v122
    %v124 = vstv %s62
    %v125 = vadd.f32 %v123, %v124
    %v126 = vmax.f32 %v125, 0.0
    %v127 = vstv %s59
    %v128 = vmul.f32 %v87, %v127
    %v129 = vstv %s60
    %v130 = vmul.f32 %v101, %v129
    %v131 = vadd.f32 %v128, %v130
    %v132 = vstv %s61
    %v133 = vmul.f32 %v115, %v132
    %v134 = vadd.f32 %v131, %v133
    %v135 = vstv %s63
    %v136 = vadd.f32 %v134, %v135
    %v137 = vmax.f32 %v136, 0.0
    %v138 = vstv %s64
    %v139 = vmul.f32 %v126, %v138
    %v140 = vstv %s65
    %v141 = vmul.f32 %v137, %v140
    %v142 = vadd.f32 %v139, %v141
    %v143 = vstv %s66
    %v144 = vadd.f32 %v142, %v143
    %v145 = vmul.f32 %v144, 0.5
    %v146 = vtanh.pop %v145
    %v147 = vmul.f32 %v146, 0.5
    %v148 = vadd.f32 %v147, 0.5
    %149 = vst [vmem:[#allocation7] sm:$0xff] %v148
    // Predicated region
    $region18: #{tpu_custom_call.1} parent=1 // pred_check
      _
    $region19: #{tpu_custom_call.1} parent=1 // pred_check_branch
      %151 = sbr.rel (0) target = $region21
    $region20: #{tpu_custom_call.1} parent=1 // pred_region
      %153 = vsyncadd [#allocation4], 0
      %s155 = sshll.u32 [#allocation7], 4
      %s156 = int_to_ptr.vmem [resolvable:$true] %s155
      %s157 = sshll.u32 %s2, 4
      %s158 = int_to_ptr.hbm [resolvable:$true] %s157
      %160 = dma.vmem_to_hbm [thread:$0]  %s156, 128, %s158, [#allocation4]
    $region21: #{tpu_custom_call.1} parent=1 // pred_fallthru
      _
    // Predicated region
    $region22: #{tpu_custom_call.1} parent=1 // pred_check
      _
    $region23: #{tpu_custom_call.1} parent=1 // pred_check_branch
      %162 = sbr.rel (0) target = $region25
    $region24: #{tpu_custom_call.1} parent=1 // pred_region
      %164 = dma.done [#allocation4], 128
    $region25: #{tpu_custom_call.1} parent=1 // pred_fallthru
      _
    %165 = vsyncpa [#allocation3], 1
    %166 = vsyncpa [#allocation4], 1
    %167 = vsyncpa [#allocation5], 1

</llo_original>
